<compile_context>
chip_gen: v7x
topology: tpu7x:2x2x1
jax: 0.10.0
libtpu: 0.0.40
codegen_flags: <defaults>
</compile_context>

<pallas_src>
import jax
import jax.numpy as jnp
from jax.experimental import pallas as pl
from jax.experimental.pallas import tpu as pltpu


# ------------------------- Pallas kernel -------------------------

def _make_periodic_pad_kernel(C, H, W, p):
    def kernel(x_ref, o_ref):
        x = x_ref[...]                                        # (1, C, H, W)
        # Circular padding along W (lane axis): [x[..., -p:], x, x[..., :p]]
        xw = jnp.concatenate([x[..., W - p:], x, x[..., :p]], axis=-1)
        # Zero padding along H (sublane axis)
        zrows = jnp.zeros((1, C, p, W + 2 * p), x.dtype)
        o_ref[...] = jnp.concatenate([zrows, xw, zrows], axis=-2)
    return kernel


# ------------------------- wrapper -------------------------

def periodic_padding_2d(x, pad_width):
    """x: (B, C, H, W) -> (B, C, H + 2*pad, W + 2*pad)."""
    if pad_width == 0:
        return x
    B, C, H, W = x.shape
    p = int(pad_width)
    kernel = _make_periodic_pad_kernel(C, H, W, p)
    return pl.pallas_call(
        kernel,
        out_shape=jax.ShapeDtypeStruct((B, C, H + 2 * p, W + 2 * p), x.dtype),
        grid=(B,),
        in_specs=[pl.BlockSpec((1, C, H, W), lambda b: (b, 0, 0, 0))],
        out_specs=pl.BlockSpec((1, C, H + 2 * p, W + 2 * p),
                               lambda b: (b, 0, 0, 0)),
        compiler_params=pltpu.CompilerParams(
            dimension_semantics=("parallel",)),
    )(x)


# ------------------------- pure-JAX reference -------------------------

def reference_periodic_padding_2d(x, pad_width):
    if pad_width == 0:
        return x
    p = pad_width
    xp = jnp.concatenate([x[:, :, :, -p:], x, x[:, :, :, :p]], axis=-1)
    return jnp.pad(xp, ((0, 0), (0, 0), (p, p), (0, 0)))


if __name__ == "__main__":
    B, C, H, W, pad = 2, 4, 16, 16, 1
    key = jax.random.PRNGKey(0)
    x = jax.random.normal(key, (B, C, H, W), jnp.float32)

    fwd = jax.jit(periodic_padding_2d, static_argnums=1)
    out = jax.block_until_ready(fwd(x, pad))
    assert out.shape == (B, C, H + 2 * pad, W + 2 * pad), out.shape

    ref = reference_periodic_padding_2d(x, pad)
    if not jnp.array_equal(out, ref):
        max_err = float(jnp.max(jnp.abs(out - ref)))
        raise AssertionError(f"mismatch vs reference, max abs err = {max_err}")

    print("KERNEL_OK")
</pallas_src>

<mosaic_0001>
module attributes {stable_mosaic.version = 11 : i64} {
  func.func @kernel(%arg0: i32, %arg1: memref<1x4x16x16xf32, #tpu.memory_space<vmem>>, %arg2: memref<1x4x18x18xf32, #tpu.memory_space<vmem>>) attributes {dimension_semantics = [#tpu.dimension_semantics<parallel>], iteration_bounds = array<i64: 2>, scalar_prefetch = 0 : i64, scratch_operands = 0 : i64, tpu.core_type = #tpu.core_type<tc>, window_params = [{transform_indices = @transform_0, window_bounds = array<i64: 1, 4, 16, 16>}, {transform_indices = @transform_1, window_bounds = array<i64: 1, 4, 18, 18>}]} {
    %c0 = arith.constant 0 : index
    %c0_0 = arith.constant 0 : index
    %c0_1 = arith.constant 0 : index
    %c0_2 = arith.constant 0 : index
    %0 = vector.load %arg1[%c0, %c0_0, %c0_1, %c0_2] : memref<1x4x16x16xf32, #tpu.memory_space<vmem>>, vector<1x4x16x16xf32>
    %1 = vector.extract_strided_slice %0 {offsets = [0, 0, 0, 15], sizes = [1, 4, 16, 1], strides = [1, 1, 1, 1]} : vector<1x4x16x16xf32> to vector<1x4x16x1xf32>
    %2 = vector.extract_strided_slice %0 {offsets = [0, 0, 0, 0], sizes = [1, 4, 16, 1], strides = [1, 1, 1, 1]} : vector<1x4x16x16xf32> to vector<1x4x16x1xf32>
    %3 = tpu.concatenate %1, %0, %2 in 3 : vector<1x4x16x1xf32>, vector<1x4x16x16xf32>, vector<1x4x16x1xf32> -> vector<1x4x16x18xf32>
    %cst = arith.constant 0.000000e+00 : f32
    %4 = vector.broadcast %cst : f32 to vector<1x4x1x18xf32>
    %5 = tpu.concatenate %4, %3, %4 in 2 : vector<1x4x1x18xf32>, vector<1x4x16x18xf32>, vector<1x4x1x18xf32> -> vector<1x4x18x18xf32>
    %c0_3 = arith.constant 0 : index
    %c0_4 = arith.constant 0 : index
    %c0_5 = arith.constant 0 : index
    %c0_6 = arith.constant 0 : index
    %6 = vector.load %arg2[%c0_3, %c0_4, %c0_5, %c0_6] : memref<1x4x18x18xf32, #tpu.memory_space<vmem>>, vector<1x4x18x18xf32>
    tpu.vector_store %arg2[%c0_3, %c0_4, %c0_5, %c0_6], %5 {strides = array<i32>} : memref<1x4x18x18xf32, #tpu.memory_space<vmem>>, vector<1x4x18x18xf32>,
    return
  }
  func.func @transform_0(%arg0: i32) -> (i32, i32, i32, i32) {
    %c0_i32 = arith.constant 0 : i32
    %c0_i32_0 = arith.constant 0 : i32
    %c0_i32_1 = arith.constant 0 : i32
    %c0_i32_2 = arith.constant 0 : i32
    return %arg0, %c0_i32, %c0_i32_0, %c0_i32_1 : i32, i32, i32, i32
  }
  func.func @transform_1(%arg0: i32) -> (i32, i32, i32, i32) {
    %c0_i32 = arith.constant 0 : i32
    %c0_i32_0 = arith.constant 0 : i32
    %c0_i32_1 = arith.constant 0 : i32
    %c0_i32_2 = arith.constant 0 : i32
    return %arg0, %c0_i32, %c0_i32_0, %c0_i32_1 : i32, i32, i32, i32
  }
}

</mosaic_0001>

<llo_original>
// kernel: periodic_padding_2d.1
$region0: #{periodic_padding_2d.1}
  #allocation0 [shape = 'u32[]', space=smem, size = 0x4, offset = 0x4, fixed_abs, tag = 'smem constant byte address 0x4 - core index']
  #allocation1 [shape = 'u32[144,128]{1,0:T(1,128)}', space=vmem, size = 0x12000, scoped, tag = 'internal scratch']
  %s0 = inlined_call_operand.hbm [shape: f32[2,4,16,16], index: 0, kind: input, shape index: {}]
  %s1 = inlined_call_operand.vmem [shape: f32[2,4,18,18], index: 1, kind: output, shape index: {}]
  %s2 = sld [smem:[#allocation0]]
  $region41: #{periodic_padding_2d.1} parent=0
    _
  %s4 = ssub.s32 1, %s2
  %s5 = scalar_select 0, %s4, %s2
  $region1: #{periodic_padding_2d.1} parent=0
    #allocation2 [shape = 'u8[65536]{0}', space=vmem, size = 0x10000, scoped, tag = 'input window, operand 0']
    #allocation3 [shape = 's32[2]{0}', space=sflag, size = 0x8, scoped, tag = 'scoped memory for periodic_padding_2d.1']
    %6 = vsyncpa [#allocation3], 0
    %s7 = scalar_lea.sflag [#allocation3], 1
    %8 = vsyncpa %s7, 0
    loop: start=0, step=1, limit=4
    $region2: #{periodic_padding_2d.1} parent=1 // loop_pre_header
      _
    $region3: #{periodic_padding_2d.1} parent=1 // loop_header
      %s10 = sphi 0, %s14
      %p11 = scmp.ge.s32.totalorder %s10, 4
      %s20 = sphi 0, %s22
      %s23 = sphi 0, %s20
      %s24 = sphi 0, %s23
      %s40 = sphi 0, %s24
      %s46 = sphi 0, %s48
      %s49 = sphi 0, %s46
      %s50 = sphi 0, %s49
      %s66 = sphi 0, %s50
    $region4: #{periodic_padding_2d.1} parent=1 // loop_header_branch
      %13 = sbr.rel (%p11) target = $region8
    $region5: #{periodic_padding_2d.1} parent=1 // loop_body
      %s15 = ssub.s32 %s10, 1
      %s16 = ssub.s32 %s10, 2
      %s17 = sadd.s32 %s10, 1
      %s18 = ssub.s32 %s10, %s17
      %p19 = scmp.eq.s32.totalorder %s18, 0
      %s21 = sadd.s32 %s20, 1
      %s22 = scalar_select %p19, %s20, %s21
      %p25 = pneg %p19
      %p26 = scmp.eq.s32.totalorder %s10, 1
      %p27 = por %p25, %p26
      %p28 = scmp.ne.s32.totalorder %s20, %s23
      %p29 = scmp.eq.s32.totalorder %s10, 0
      %p30 = por %p28, %p29
      %p31 = scmp.ne.s32.totalorder %s20, %s23
      %p32 = scmp.eq.s32.totalorder %s15, 1
      %p33 = por %p31, %p32
      %p34 = scmp.ne.s32.totalorder %s23, %s24
      %p35 = scmp.eq.s32.totalorder %s15, 0
      %p36 = por %p34, %p35
      %p37 = scmp.ne.s32.totalorder %s23, %s24
      %p38 = scmp.eq.s32.totalorder %s16, 1
      %p39 = por %p37, %p38
      %p41 = scmp.ne.s32.totalorder %s24, %s40
      %p42 = scmp.eq.s32.totalorder %s16, 0
      %p43 = por %p41, %p42
      %s44 = ssub.s32 %s10, %s17
      %p45 = scmp.eq.s32.totalorder %s44, 0
      %s47 = sadd.s32 %s46, 1
      %s48 = scalar_select %p45, %s46, %s47
      %p51 = pneg %p45
      %p52 = scmp.eq.s32.totalorder %s10, 1
      %p53 = por %p51, %p52
      %p54 = scmp.ne.s32.totalorder %s46, %s49
      %p55 = scmp.eq.s32.totalorder %s10, 0
      %p56 = por %p54, %p55
      %p57 = scmp.ne.s32.totalorder %s46, %s49
      %p58 = scmp.eq.s32.totalorder %s15, 1
      %p59 = por %p57, %p58
      %p60 = scmp.ne.s32.totalorder %s49, %s50
      %p61 = scmp.eq.s32.totalorder %s15, 0
      %p62 = por %p60, %p61
      %p63 = scmp.ne.s32.totalorder %s49, %s50
      %p64 = scmp.eq.s32.totalorder %s16, 1
      %p65 = por %p63, %p64
      %p67 = scmp.ne.s32.totalorder %s50, %s66
      %p68 = scmp.eq.s32.totalorder %s16, 0
      %p69 = por %p67, %p68
      %p70 = scmp.le.s32.totalorder 1, %s10
      %p71 = scmp.lt.s32.totalorder %s10, 3
      %p72 = pnand %p70, %p71
      %p73 = pneg %p72
      // Predicated region
      $region9: #{periodic_padding_2d.1} parent=5 // pred_check
        _
      $region10: #{periodic_padding_2d.1} parent=5 // pred_check_branch
        %75 = sbr.rel (%p72) target = $region12
      $region11: #{periodic_padding_2d.1} parent=5 // pred_region
        %s76 = ssub.s32 %s10, 1
      $region12: #{periodic_padding_2d.1} parent=5 // pred_fallthru
        _
      %p77 = scmp.lt.s32.totalorder %s10, 2
      // Predicated region
      $region13: #{periodic_padding_2d.1} parent=5 // pred_check
        %p78 = pneg %p77
      $region14: #{periodic_padding_2d.1} parent=5 // pred_check_branch
        %80 = sbr.rel (%p78) target = $region16
      $region15: #{periodic_padding_2d.1} parent=5 // pred_region
        // Predicated region
        $region17: #{periodic_padding_2d.1} parent=15 // pred_check
          %p81 = pneg %p30
        $region18: #{periodic_padding_2d.1} parent=15 // pred_check_branch
          %83 = sbr.rel (%p81) target = $region20
        $region19: #{periodic_padding_2d.1} parent=15 // pred_region
          %s84 = sand.u32 %s20, 1
          %s85 = scalar_lea.sflag [#allocation3], %s84
          %s86 = sand.u32 %s20, 1
          %s87 = smul.addr %s86, 64
          %s88 = scalar_lea.vmem [#allocation2], %s87
          %s90 = ssub.s32 1024, 1024
          %91 = vsyncadd %s85, %s90
          %s92 = smul.addr %s10, 8
          %s93 = smul.addr %s92, 128
          %s94 = scalar_lea.hbm %s0, %s93
          %s95 = sshll.u32 %s88, 4
          %s96 = int_to_ptr.vmem [resolvable:$true] %s95
          %101 = dma.hbm_to_vmem [thread:$0]  %s94, 1024, %s96, %s85, 128, 128, 8
        $region20: #{periodic_padding_2d.1} parent=15 // pred_fallthru
          _
      $region16: #{periodic_padding_2d.1} parent=5 // pred_fallthru
        _
      %p102 = scmp.le.s32.totalorder 1, %s10
      %p103 = scmp.lt.s32.totalorder %s10, 3
      %p104 = pnand %p102, %p103
      %p105 = pneg %p104
      // Predicated region
      $region21: #{periodic_padding_2d.1} parent=5 // pred_check
        _
      $region22: #{periodic_padding_2d.1} parent=5 // pred_check_branch
        %107 = sbr.rel (%p104) target = $region24
      $region23: #{periodic_padding_2d.1} parent=5 // pred_region
        %s108 = ssub.s32 %s10, 1
        %s109 = sand.u32 %s23, 1
        %s110 = scalar_lea.sflag [#allocation3], %s109
        %s111 = sand.u32 %s23, 1
        %s112 = smul.addr %s111, 64
        %s113 = scalar_lea.vmem [#allocation2], %s112
        // Predicated region
        $region25: #{periodic_padding_2d.1} parent=23 // pred_check
          %p114 = pneg %p36
        $region26: #{periodic_padding_2d.1} parent=23 // pred_check_branch
          %116 = sbr.rel (%p114) target = $region28
        $region27: #{periodic_padding_2d.1} parent=23 // pred_region
          %117 = dma.done %s110, 1024
        $region28: #{periodic_padding_2d.1} parent=23 // pred_fallthru
          _
        %s118 = sand.u32 %s23, 1
        %s119 = scalar_lea.sflag [#allocation3], %s118
        %s120 = sand.u32 %s23, 1
        %s121 = smul.addr %s120, 64
        %s122 = scalar_lea.vmem [#allocation2], %s121
        %p123 = pneg %p36
        %p124 = pneg %p33
        %p125 = pneg %p62
        %p126 = pneg %p59
        %p127 = scmp.lt.s32.totalorder %s15, 1
        %s128 = scalar_select %p127, %s15, 1
        %s129 = smul.addr %s128, 12
        %s130 = smul.addr %s129, 8
        %s131 = scalar_lea.vmem %s1, %s130
        %p132 = scmp.lt.s32.totalorder %s15, 1
        %s133 = scalar_select %p132, %s15, 1
        %s134 = smul.addr %s133, 12
        %s135 = smul.addr %s134, 8
        %s136 = scalar_lea.vmem %s1, %s135
        %v137 = vld [vmem:[%s113] sm:$0xff]
        %v138 = vld [vmem:[%s113 + $0x8] sm:$0xff]
        %v139 = vld [vmem:[%s113 + $0x10] sm:$0xff]
        %v140 = vld [vmem:[%s113 + $0x18] sm:$0xff]
        %v141 = vld [vmem:[%s113 + $0x20] sm:$0xff]
        %v142 = vld [vmem:[%s113 + $0x28] sm:$0xff]
        %v143 = vld [vmem:[%s113 + $0x30] sm:$0xff]
        %v144 = vld [vmem:[%s113 + $0x38] sm:$0xff]
        %153 = vrot.lane.b32.xlu0 %v137, 113
        %v154 = vpop.permute.xlu0 %153
        %155 = vrot.lane.b32.xlu0 %v138, 113
        %v156 = vpop.permute.xlu0 %155
        %157 = vrot.lane.b32.xlu0 %v139, 113
        %v158 = vpop.permute.xlu0 %157
        %159 = vrot.lane.b32.xlu0 %v140, 113
        %v160 = vpop.permute.xlu0 %159
        %161 = vrot.lane.b32.xlu0 %v141, 113
        %v162 = vpop.permute.xlu0 %161
        %163 = vrot.lane.b32.xlu0 %v142, 113
        %v164 = vpop.permute.xlu0 %163
        %165 = vrot.lane.b32.xlu0 %v143, 113
        %v166 = vpop.permute.xlu0 %165
        %167 = vrot.lane.b32.xlu0 %v144, 113
        %v168 = vpop.permute.xlu0 %167
        %177 = vrot.lane.b32.xlu0 %v137, 1
        %v178 = vpop.permute.xlu0 %177
        %179 = vrot.lane.b32.xlu0 %v138, 1
        %v180 = vpop.permute.xlu0 %179
        %181 = vrot.lane.b32.xlu0 %v139, 1
        %v182 = vpop.permute.xlu0 %181
        %183 = vrot.lane.b32.xlu0 %v140, 1
        %v184 = vpop.permute.xlu0 %183
        %185 = vrot.lane.b32.xlu0 %v141, 1
        %v186 = vpop.permute.xlu0 %185
        %187 = vrot.lane.b32.xlu0 %v142, 1
        %v188 = vpop.permute.xlu0 %187
        %189 = vrot.lane.b32.xlu0 %v143, 1
        %v190 = vpop.permute.xlu0 %189
        %191 = vrot.lane.b32.xlu0 %v144, 1
        %v192 = vpop.permute.xlu0 %191
        %201 = vrot.lane.b32.xlu0 %v137, 17
        %v202 = vpop.permute.xlu0 %201
        %203 = vrot.lane.b32.xlu0 %v138, 17
        %v204 = vpop.permute.xlu0 %203
        %205 = vrot.lane.b32.xlu0 %v139, 17
        %v206 = vpop.permute.xlu0 %205
        %207 = vrot.lane.b32.xlu0 %v140, 17
        %v208 = vpop.permute.xlu0 %207
        %209 = vrot.lane.b32.xlu0 %v141, 17
        %v210 = vpop.permute.xlu0 %209
        %211 = vrot.lane.b32.xlu0 %v142, 17
        %v212 = vpop.permute.xlu0 %211
        %213 = vrot.lane.b32.xlu0 %v143, 17
        %v214 = vpop.permute.xlu0 %213
        %215 = vrot.lane.b32.xlu0 %v144, 17
        %v216 = vpop.permute.xlu0 %215
        %vm225 = vcmask 7168
        %v226 = vsel %vm225, %v154, %v178
        %v227 = vsel %vm225, %v156, %v180
        %v228 = vsel %vm225, %v158, %v182
        %v229 = vsel %vm225, %v160, %v184
        %v230 = vsel %vm225, %v162, %v186
        %v231 = vsel %vm225, %v164, %v188
        %v232 = vsel %vm225, %v166, %v190
        %v233 = vsel %vm225, %v168, %v192
        %vm234 = vcmask 138240
        %v235 = vsel %vm234, %v226, %v202
        %v236 = vsel %vm234, %v227, %v204
        %v237 = vsel %vm234, %v228, %v206
        %v238 = vsel %vm234, %v229, %v208
        %v239 = vsel %vm234, %v230, %v210
        %v240 = vsel %vm234, %v231, %v212
        %v241 = vsel %vm234, %v232, %v214
        %v242 = vsel %vm234, %v233, %v216
        %vm251 = vcmask 1040384
        %v252 = vrot.slane %v235, 7
        %v253 = vrot.slane %v236, 7
        %v254 = vsel %vm251, %v252, %v253
        %v255 = vrot.slane %v237, 7
        %v256 = vrot.slane %v238, 7
        %v257 = vsel %vm251, %v255, %v256
        %v258 = vrot.slane %v239, 7
        %v259 = vrot.slane %v240, 7
        %v260 = vsel %vm251, %v258, %v259
        %v261 = vrot.slane %v241, 7
        %v262 = vrot.slane %v242, 7
        %v263 = vsel %vm251, %v261, %v262
        %v276 = vsel %vm251, 0.0, %v252
        %v277 = vsel %vm251, 0.0, %v255
        %v278 = vsel %vm251, 0.0, %v258
        %v279 = vsel %vm251, 0.0, %v261
        %v280 = vsel %vm251, %v253, 0.0
        %v281 = vsel %vm251, %v256, 0.0
        %v282 = vsel %vm251, %v259, 0.0
        %v283 = vsel %vm251, %v262, 0.0
        %vm284 = vcmask 146432
        %285 = vst.msk [vmem:[%s136] sm:$0xff] %vm284, %v276
        %286 = vst.msk [vmem:[%s136 + $0x8] sm:$0xff] %vm284, %v254
        %vm287 = vcmask 140288
        %288 = vst.msk [vmem:[%s136 + $0x10] sm:$0x3] %vm287, %v280
        %289 = vst.msk [vmem:[%s136 + $0x18] sm:$0xff] %vm284, %v277
        %290 = vst.msk [vmem:[%s136 + $0x20] sm:$0xff] %vm284, %v257
        %291 = vst.msk [vmem:[%s136 + $0x28] sm:$0x3] %vm287, %v281
        %292 = vst.msk [vmem:[%s136 + $0x30] sm:$0xff] %vm284, %v278
        %293 = vst.msk [vmem:[%s136 + $0x38] sm:$0xff] %vm284, %v260
        %294 = vst.msk [vmem:[%s136 + $0x40] sm:$0x3] %vm287, %v282
        %295 = vst.msk [vmem:[%s136 + $0x48] sm:$0xff] %vm284, %v279
        %296 = vst.msk [vmem:[%s136 + $0x50] sm:$0xff] %vm284, %v263
        %297 = vst.msk [vmem:[%s136 + $0x58] sm:$0x3] %vm287, %v283
        %p298 = scmp.lt.s32.totalorder %s15, 1
        %s299 = scalar_select %p298, %s15, 1
        %s300 = smul.addr %s299, 12
        %s301 = smul.addr %s300, 8
        %s302 = scalar_lea.vmem %s1, %s301
        // Predicated region
        $region29: #{periodic_padding_2d.1} parent=23 // pred_check
          %p303 = pneg %p59
        $region30: #{periodic_padding_2d.1} parent=23 // pred_check_branch
          %305 = sbr.rel (%p303) target = $region32
        $region31: #{periodic_padding_2d.1} parent=23 // pred_region
          _
        $region32: #{periodic_padding_2d.1} parent=23 // pred_fallthru
          _
      $region24: #{periodic_padding_2d.1} parent=5 // pred_fallthru
        _
      %p306 = scmp.le.s32.totalorder 2, %s10
      // Predicated region
      $region33: #{periodic_padding_2d.1} parent=5 // pred_check
        %p307 = pneg %p306
      $region34: #{periodic_padding_2d.1} parent=5 // pred_check_branch
        %309 = sbr.rel (%p307) target = $region36
      $region35: #{periodic_padding_2d.1} parent=5 // pred_region
        %s310 = ssub.s32 %s10, 2
        // Predicated region
        $region37: #{periodic_padding_2d.1} parent=35 // pred_check
          %p311 = pneg %p65
        $region38: #{periodic_padding_2d.1} parent=35 // pred_check_branch
          %313 = sbr.rel (%p311) target = $region40
        $region39: #{periodic_padding_2d.1} parent=35 // pred_region
          %p314 = scmp.lt.s32.totalorder %s16, 1
          %s315 = scalar_select %p314, %s16, 1
          %s316 = smul.addr %s315, 12
          %s317 = smul.addr %s316, 8
          %s318 = scalar_lea.vmem %s1, %s317
        $region40: #{periodic_padding_2d.1} parent=35 // pred_fallthru
          _
      $region36: #{periodic_padding_2d.1} parent=5 // pred_fallthru
        _
    $region6: #{periodic_padding_2d.1} parent=1 // loop_footer
      %s14 = sadd.s32 1, %s10
    $region7: #{periodic_padding_2d.1} parent=1 // loop_footer_branch
      %9 = sbr.rel target = $region3
    $region8: #{periodic_padding_2d.1} parent=1 // loop_exit
      _
    %319 = vsyncpa [#allocation3], 1
    %s320 = scalar_lea.sflag [#allocation3], 1
    %321 = vsyncpa %s320, 1

</llo_original>
